<compile_context>
chip_gen: v7x
topology: tpu7x:2x2x1
jax: 0.10.0
libtpu: 0.0.40
codegen_flags: <defaults>
</compile_context>

<pallas_src>
import jax
import jax.numpy as jnp
from jax import lax
from jax.experimental import pallas as pl
from jax.experimental.pallas import tpu as pltpu

BN_EPS = 1e-5
LANE = 128
VMEM_LIMIT_BYTES = 32 * 1024 * 1024        # >= v5e scoped default, <= v7x physical
TILE_BYTES_BUDGET = 12 * 1024 * 1024       # per-step working-set cap (all gens)


def _round_up(x, m):
    return (x + m - 1) // m * m


def _pick_batch_tile(N, L, Cp):
    """Largest divisor of N whose per-step VMEM working set fits the budget."""
    for bb in range(N, 0, -1):
        if N % bb:
            continue
        # 2x double-buffered x/conv tiles + double-buffered stacked weight
        # + ~5 tile-sized VMEM temporaries (x_prev / x_next / x3 / f32 acc).
        per_step = (2 * 2 * bb * L * Cp + 2 * 3 * Cp * Cp + 5 * bb * L * Cp) * 4
        if per_step <= TILE_BYTES_BUDGET:
            return bb
    return 1


def _conv_stats_kernel(x_ref, w_ref, conv_ref, stats_ref):
    """Pass 1: fused 3-tap conv as a single MXU matmul + per-channel sum/sumsq."""
    BB, L, Cp = x_ref.shape
    x = x_ref[...]                                               # (BB, L, Cp) f32

    # k=3, pad=1 taps built in VMEM with per-sample zero boundary rows.
    zrow = jnp.zeros((BB, 1, Cp), x.dtype)
    x_prev = jnp.concatenate([zrow, x[:, : L - 1, :]], axis=1)   # x[l-1]
    x_next = jnp.concatenate([x[:, 1:, :], zrow], axis=1)        # x[l+1]

    # Lane-axis concat -> one tall matmul with contraction K = 3*Cp.
    x3 = jnp.concatenate([x_prev, x, x_next], axis=2)            # (BB, L, 3*Cp)
    x3 = x3.reshape(BB * L, 3 * Cp)
    conv = jnp.dot(x3, w_ref[...], preferred_element_type=jnp.float32)  # (BB*L, Cp)
    conv_ref[...] = conv.reshape(BB, L, Cp)

    # One-pass BN partials for this tile: row 0 = sum, row 1 = sum of squares.
    s = jnp.sum(conv, axis=0, keepdims=True)                     # (1, Cp)
    ss = jnp.sum(conv * conv, axis=0, keepdims=True)             # (1, Cp)
    stats_ref[...] = jnp.concatenate(
        [s, ss, jnp.zeros((6, Cp), jnp.float32)], axis=0)        # (8, Cp)


def _bn_relu_add_kernel(conv_ref, x_ref, scale_ref, bias_ref, o_ref):
    """Pass 2: bn = conv*scale + bias (folded BN), ReLU, residual add, ReLU."""
    Cp = scale_ref.shape[-1]
    scale = scale_ref[...].reshape(1, 1, Cp)
    bias = bias_ref[...].reshape(1, 1, Cp)
    bn = conv_ref[...] * scale + bias
    out = jnp.maximum(bn, 0.0) + x_ref[...]
    o_ref[...] = jnp.maximum(out, 0.0).astype(o_ref.dtype)


def basic_block_3x3(x_ncl, w_oik3, gamma, beta):
    """Forward of BasicBlock3x3 (stride=1, downsample=None).

    x_ncl:  (N, C, L) float32  -- PyTorch NCL layout.
    w_oik3: (C, C, 3) float32  -- Conv1d weight (out, in, k).
    gamma, beta: (C,) float32  -- BatchNorm1d affine params (training-mode stats).
    Returns (N, C, L) float32.
    """
    N, C, L = x_ncl.shape
    Cout, Cin, K = w_oik3.shape
    assert K == 3 and Cin == C and Cout == C, "residual path requires planes == inplanes"

    Cp = max(LANE, _round_up(C, LANE))            # lane-dense channel axis
    BB = _pick_batch_tile(N, L, Cp)               # samples per grid step
    T = N // BB                                   # grid extent
    per_step = (2 * 2 * BB * L * Cp + 2 * 3 * Cp * Cp + 5 * BB * L * Cp) * 4
    assert per_step <= TILE_BYTES_BUDGET, "tile too large for VMEM; also tile along L"

    # ---- layout plumbing (wrapper-side): lane-dense NLC --------------------
    x_nlc = jnp.transpose(x_ncl, (0, 2, 1))                        # (N, L, C)
    x_p = jnp.pad(x_nlc, ((0, 0), (0, 0), (0, Cp - C)))            # (N, L, Cp)

    # Stacked tap weight: rows [t*Cp : t*Cp + C] hold w[:, :, t].T
    w_taps = jnp.transpose(w_oik3, (2, 1, 0))                      # (3, Cin, Cout)
    w_taps = jnp.pad(w_taps, ((0, 0), (0, Cp - C), (0, Cp - C)))   # (3, Cp, Cp)
    w_stacked = w_taps.reshape(3 * Cp, Cp)

    gamma_p = jnp.pad(gamma, (0, Cp - C))
    beta_p = jnp.pad(beta, (0, Cp - C))

    cparams = pltpu.CompilerParams(
        dimension_semantics=("parallel",),       # megacore split on v7x
        vmem_limit_bytes=VMEM_LIMIT_BYTES,
    )

    # ---- pass 1: conv + per-tile BN partial statistics ---------------------
    conv_out, stats = pl.pallas_call(
        _conv_stats_kernel,
        grid=(T,),
        in_specs=[
            pl.BlockSpec((BB, L, Cp), lambda n: (n, 0, 0)),
            pl.BlockSpec((3 * Cp, Cp), lambda n: (0, 0)),
        ],
        out_specs=(
            pl.BlockSpec((BB, L, Cp), lambda n: (n, 0, 0)),
            pl.BlockSpec((pl.Squeezed(), 8, Cp), lambda n: (n, 0, 0)),
        ),
        out_shape=(
            jax.ShapeDtypeStruct((N, L, Cp), jnp.float32),
            jax.ShapeDtypeStruct((T, 8, Cp), jnp.float32),
        ),
        compiler_params=cparams,
        cost_estimate=pl.CostEstimate(
            flops=2 * N * L * (3 * Cp) * Cp,
            transcendentals=0,
            bytes_accessed=4 * (2 * N * L * Cp + 3 * Cp * Cp + T * 8 * Cp),
        ),
    )(x_p, w_stacked)

    # ---- tiny per-channel fold of BN constants (plain JAX, O(C) work) ------
    cnt = jnp.float32(N * L)
    mean = jnp.sum(stats[:, 0, :], axis=0) / cnt
    var = jnp.maximum(jnp.sum(stats[:, 1, :], axis=0) / cnt - mean * mean, 0.0)
    scale = gamma_p * lax.rsqrt(var + BN_EPS)                    # (Cp,)
    bias = beta_p - mean * scale                                 # (Cp,)

    # ---- pass 2: normalize + ReLU + residual + ReLU -------------------------
    out_p = pl.pallas_call(
        _bn_relu_add_kernel,
        grid=(T,),
        in_specs=[
            pl.BlockSpec((BB, L, Cp), lambda n: (n, 0, 0)),
            pl.BlockSpec((BB, L, Cp), lambda n: (n, 0, 0)),
            pl.BlockSpec((1, Cp), lambda n: (0, 0)),
            pl.BlockSpec((1, Cp), lambda n: (0, 0)),
        ],
        out_specs=pl.BlockSpec((BB, L, Cp), lambda n: (n, 0, 0)),
        out_shape=jax.ShapeDtypeStruct((N, L, Cp), x_ncl.dtype),
        compiler_params=cparams,
        cost_estimate=pl.CostEstimate(
            flops=4 * N * L * Cp,
            transcendentals=0,
            bytes_accessed=4 * (3 * N * L * Cp + 2 * Cp),
        ),
    )(conv_out, x_p, scale.reshape(1, Cp), bias.reshape(1, Cp))

    # ---- back to PyTorch NCL, drop channel padding ---------------------------
    return jnp.transpose(out_p[:, :, :C], (0, 2, 1))


def reference(x_ncl, w_oik3, gamma, beta):
    """Pure-JAX reference matching PyTorch BasicBlock3x3 forward (training-mode BN)."""
    conv = lax.conv_general_dilated(
        x_ncl, w_oik3, window_strides=(1,), padding=((1, 1),),
        dimension_numbers=('NCH', 'OIH', 'NCH'))
    mean = jnp.mean(conv, axis=(0, 2), keepdims=True)
    var = jnp.mean((conv - mean) ** 2, axis=(0, 2), keepdims=True)
    bn = (conv - mean) * lax.rsqrt(var + BN_EPS) * gamma[None, :, None] + beta[None, :, None]
    out = jnp.maximum(bn, 0.0) + x_ncl
    return jnp.maximum(out, 0.0)


if __name__ == "__main__":
    # TODO(synk): BatchNorm1d's running_mean/running_var momentum update is a
    # training-time side effect with no output; it is not modeled here.
    N, C, L = 2, 16, 32  # inplanes3 = planes = 16, stride = 1, downsample = None
    key = jax.random.PRNGKey(0)
    kx, kw, kg, kb = jax.random.split(key, 4)

    x_ncl = jax.random.normal(kx, (N, C, L), dtype=jnp.float32)       # PyTorch NCL input
    fan_in = C * 3
    w = jax.random.normal(kw, (C, C, 3), dtype=jnp.float32) / jnp.sqrt(fan_in)
    gamma = 1.0 + 0.1 * jax.random.normal(kg, (C,), dtype=jnp.float32)
    beta = 0.1 * jax.random.normal(kb, (C,), dtype=jnp.float32)

    out = jax.block_until_ready(basic_block_3x3(x_ncl, w, gamma, beta))
    ref = jax.block_until_ready(reference(x_ncl, w, gamma, beta))

    assert out.shape == (N, C, L)
    assert jnp.allclose(out, ref, atol=1e-4, rtol=1e-4), "mismatch vs reference"
    print("KERNEL_OK")
</pallas_src>

<mosaic_0001>
module attributes {stable_mosaic.version = 11 : i64} {
  func.func @_conv_stats_kernel(%arg0: i32, %arg1: memref<2x32x128xf32, #tpu.memory_space<vmem>>, %arg2: memref<384x128xf32, #tpu.memory_space<vmem>>, %arg3: memref<2x32x128xf32, #tpu.memory_space<vmem>>, %arg4: memref<1x8x128xf32, #tpu.memory_space<vmem>>) attributes {dimension_semantics = [#tpu.dimension_semantics<parallel>], iteration_bounds = array<i64: 1>, scalar_prefetch = 0 : i64, scratch_operands = 0 : i64, tpu.core_type = #tpu.core_type<tc>, window_params = [{transform_indices = @transform_0, window_bounds = array<i64: 2, 32, 128>}, {pipeline_mode = #tpu.pipeline_mode<synchronous>, transform_indices = @transform_1, window_bounds = array<i64: 384, 128>}, {transform_indices = @transform_2, window_bounds = array<i64: 2, 32, 128>}, {transform_indices = @transform_3, window_bounds = array<i64: 1, 8, 128>}]} {
    %c0 = arith.constant 0 : index
    %c0_0 = arith.constant 0 : index
    %c0_1 = arith.constant 0 : index
    %0 = vector.load %arg1[%c0, %c0_0, %c0_1] : memref<2x32x128xf32, #tpu.memory_space<vmem>>, vector<2x32x128xf32>
    %cst = arith.constant 0.000000e+00 : f32
    %1 = vector.broadcast %cst : f32 to vector<2x1x128xf32>
    %2 = vector.extract_strided_slice %0 {offsets = [0, 0, 0], sizes = [2, 31, 128], strides = [1, 1, 1]} : vector<2x32x128xf32> to vector<2x31x128xf32>
    %3 = tpu.concatenate %1, %2 in 1 : vector<2x1x128xf32>, vector<2x31x128xf32> -> vector<2x32x128xf32>
    %4 = vector.extract_strided_slice %0 {offsets = [0, 1, 0], sizes = [2, 31, 128], strides = [1, 1, 1]} : vector<2x32x128xf32> to vector<2x31x128xf32>
    %5 = tpu.concatenate %4, %1 in 1 : vector<2x31x128xf32>, vector<2x1x128xf32> -> vector<2x32x128xf32>
    %6 = tpu.concatenate %3, %0, %5 in 2 : vector<2x32x128xf32>, vector<2x32x128xf32>, vector<2x32x128xf32> -> vector<2x32x384xf32>
    %7 = vector.shape_cast %6 : vector<2x32x384xf32> to vector<64x384xf32>
    %c0_2 = arith.constant 0 : index
    %c0_3 = arith.constant 0 : index
    %8 = vector.load %arg2[%c0_2, %c0_3] : memref<384x128xf32, #tpu.memory_space<vmem>>, vector<384x128xf32>
    %cst_4 = arith.constant dense<0.000000e+00> : vector<64x128xf32>
    %9 = tpu.matmul %7, %8, %cst_4 {dimension_numbers = #tpu.dot_dimension_numbers<[1], [0], [0], [1], [0, 0, 1, 1], [], []>} : vector<64x384xf32>, vector<384x128xf32>, vector<64x128xf32> -> vector<64x128xf32>
    %10 = vector.shape_cast %9 : vector<64x128xf32> to vector<2x32x128xf32>
    %c0_5 = arith.constant 0 : index
    %c0_6 = arith.constant 0 : index
    %c0_7 = arith.constant 0 : index
    %11 = vector.load %arg3[%c0_5, %c0_6, %c0_7] : memref<2x32x128xf32, #tpu.memory_space<vmem>>, vector<2x32x128xf32>
    tpu.vector_store %arg3[%c0_5, %c0_6, %c0_7], %10 {strides = array<i32>} : memref<2x32x128xf32, #tpu.memory_space<vmem>>, vector<2x32x128xf32>,
    %cst_8 = arith.constant dense<0.000000e+00> : vector<128xf32>
    %12 = vector.multi_reduction <add>, %9, %cst_8 [0] : vector<64x128xf32> to vector<128xf32>
    %13 = vector.shape_cast %12 : vector<128xf32> to vector<1x128xf32>
    %14 = arith.mulf %9, %9 : vector<64x128xf32>
    %cst_9 = arith.constant dense<0.000000e+00> : vector<128xf32>
    %15 = vector.multi_reduction <add>, %14, %cst_9 [0] : vector<64x128xf32> to vector<128xf32>
    %16 = vector.shape_cast %15 : vector<128xf32> to vector<1x128xf32>
    %cst_10 = arith.constant 0.000000e+00 : f32
    %17 = vector.broadcast %cst_10 : f32 to vector<6x128xf32>
    %18 = tpu.concatenate %13, %16, %17 in 0 : vector<1x128xf32>, vector<1x128xf32>, vector<6x128xf32> -> vector<8x128xf32>
    %c0_11 = arith.constant 0 : index
    %c0_12 = arith.constant 0 : index
    %c0_13 = arith.constant 0 : index
    %19 = vector.load %arg4[%c0_11, %c0_12, %c0_13] : memref<1x8x128xf32, #tpu.memory_space<vmem>>, vector<1x8x128xf32>
    %20 = vector.shape_cast %19 : vector<1x8x128xf32> to vector<8x128xf32>
    %21 = vector.shape_cast %18 : vector<8x128xf32> to vector<1x8x128xf32>
    tpu.vector_store %arg4[%c0_11, %c0_12, %c0_13], %21 {strides = array<i32>} : memref<1x8x128xf32, #tpu.memory_space<vmem>>, vector<1x8x128xf32>,
    return
  }
  func.func @transform_0(%arg0: i32) -> (i32, i32, i32) {
    %c0_i32 = arith.constant 0 : i32
    %c0_i32_0 = arith.constant 0 : i32
    %c0_i32_1 = arith.constant 0 : i32
    return %arg0, %c0_i32, %c0_i32_0 : i32, i32, i32
  }
  func.func @transform_1(%arg0: i32) -> (i32, i32) {
    %c0_i32 = arith.constant 0 : i32
    %c0_i32_0 = arith.constant 0 : i32
    %c0_i32_1 = arith.constant 0 : i32
    return %c0_i32, %c0_i32_0 : i32, i32
  }
  func.func @transform_2(%arg0: i32) -> (i32, i32, i32) {
    %c0_i32 = arith.constant 0 : i32
    %c0_i32_0 = arith.constant 0 : i32
    %c0_i32_1 = arith.constant 0 : i32
    return %arg0, %c0_i32, %c0_i32_0 : i32, i32, i32
  }
  func.func @transform_3(%arg0: i32) -> (i32, i32, i32) {
    %c0_i32 = arith.constant 0 : i32
    %c0_i32_0 = arith.constant 0 : i32
    %c0_i32_1 = arith.constant 0 : i32
    return %arg0, %c0_i32, %c0_i32_0 : i32, i32, i32
  }
}

</mosaic_0001>

<llo_original>
// kernel: tpu_custom_call.1
$region0: #{tpu_custom_call.1}
  #allocation0 [shape = 'u32[]', space=smem, size = 0x4, offset = 0x4, fixed_abs, tag = 'smem constant byte address 0x4 - core index']
  #allocation1 [shape = 'u32[144,128]{1,0:T(1,128)}', space=vmem, size = 0x12000, scoped, tag = 'internal scratch']
  %s0 = inlined_call_operand.hbm [shape: f32[2,32,128], index: 0, kind: input, shape index: {}]
  %s1 = inlined_call_operand.hbm [shape: f32[384,128], index: 1, kind: input, shape index: {}]
  %s2 = inlined_call_operand.hbm [shape: f32[2,32,128], index: 2, kind: output, shape index: {0}]
  %s3 = inlined_call_operand.hbm [shape: f32[1,8,128], index: 3, kind: output, shape index: {1}]
  %4 = xla_tuple %s2, %s3
  %s5 = sld [smem:[#allocation0]]
  $region34: #{tpu_custom_call.1} parent=0
    _
  %s7 = ssub.s32 1, %s5
  %s8 = scalar_select 0, %s7, %s5
  $region1: #{tpu_custom_call.1} parent=0
    #allocation2 [shape = 'u8[32768]{0}', space=vmem, size = 0x8000, scoped, tag = 'input window, operand 0, single buffered']
    #allocation3 [shape = 's32[1]{0}', space=sflag, size = 0x4, scoped, tag = 'scoped memory for tpu_custom_call.1']
    #allocation4 [shape = 's32[1]{0}', space=sflag, size = 0x4, scoped, tag = 'scoped memory for tpu_custom_call.1']
    #allocation5 [shape = 'u8[196608]{0}', space=vmem, size = 0x30000, scoped, tag = 'input window, operand 1, single buffered']
    #allocation6 [shape = 's32[1]{0}', space=sflag, size = 0x4, scoped, tag = 'scoped memory for tpu_custom_call.1']
    #allocation7 [shape = 'u8[32768]{0}', space=vmem, size = 0x8000, scoped, tag = 'output window, operand 0, single buffered']
    #allocation8 [shape = 'u8[4096]{0}', space=vmem, size = 0x1000, scoped, tag = 'output window, operand 1, single buffered']
    #allocation9 [shape = 's32[1]{0}', space=sflag, size = 0x4, scoped, tag = 'scoped memory for tpu_custom_call.1']
    %9 = vsyncpa [#allocation3], 0
    %10 = vsyncpa [#allocation6], 0
    %11 = vsyncpa [#allocation4], 0
    %12 = vsyncpa [#allocation9], 0
    // Predicated region
    $region2: #{tpu_custom_call.1} parent=1 // pred_check
      _
    $region3: #{tpu_custom_call.1} parent=1 // pred_check_branch
      %14 = sbr.rel (0) target = $region5
    $region4: #{tpu_custom_call.1} parent=1 // pred_region
      %s16 = ssub.s32 1024, 1024
      %17 = vsyncadd [#allocation3], %s16
      %s18 = sshll.u32 [#allocation2], 4
      %s19 = int_to_ptr.vmem [resolvable:$true] %s18
      %24 = dma.hbm_to_vmem [thread:$0]  %s0, 1024, %s19, [#allocation3], 128, 128, 8
    $region5: #{tpu_custom_call.1} parent=1 // pred_fallthru
      _
    // Predicated region
    $region6: #{tpu_custom_call.1} parent=1 // pred_check
      _
    $region7: #{tpu_custom_call.1} parent=1 // pred_check_branch
      %26 = sbr.rel (0) target = $region9
    $region8: #{tpu_custom_call.1} parent=1 // pred_region
      %s28 = ssub.s32 6144, 6144
      %29 = vsyncadd [#allocation6], %s28
      %s30 = sshll.u32 [#allocation5], 4
      %s31 = int_to_ptr.vmem [resolvable:$true] %s30
      %36 = dma.hbm_to_vmem [thread:$0]  %s1, 6144, %s31, [#allocation6], 128, 128, 8
    $region9: #{tpu_custom_call.1} parent=1 // pred_fallthru
      _
    // Predicated region
    $region10: #{tpu_custom_call.1} parent=1 // pred_check
      _
    $region11: #{tpu_custom_call.1} parent=1 // pred_check_branch
      %38 = sbr.rel (0) target = $region13
    $region12: #{tpu_custom_call.1} parent=1 // pred_region
      %39 = dma.done [#allocation3], 1024
    $region13: #{tpu_custom_call.1} parent=1 // pred_fallthru
      _
    // Predicated region
    $region14: #{tpu_custom_call.1} parent=1 // pred_check
      _
    $region15: #{tpu_custom_call.1} parent=1 // pred_check_branch
      %41 = sbr.rel (0) target = $region17
    $region16: #{tpu_custom_call.1} parent=1 // pred_region
      %42 = dma.done [#allocation6], 6144
    $region17: #{tpu_custom_call.1} parent=1 // pred_fallthru
      _
    %v43 = vld [vmem:[#allocation2] sm:$0xff]
    %v44 = vld [vmem:[#allocation2 + $0x8] sm:$0xff]
    %v45 = vld [vmem:[#allocation2 + $0x10] sm:$0xff]
    %v46 = vld [vmem:[#allocation2 + $0x18] sm:$0xff]
    %v47 = vld [vmem:[#allocation2 + $0x20] sm:$0xff]
    %v48 = vld [vmem:[#allocation2 + $0x28] sm:$0xff]
    %v49 = vld [vmem:[#allocation2 + $0x30] sm:$0xff]
    %v50 = vld [vmem:[#allocation2 + $0x38] sm:$0xff]
    %vm59 = vcmask 1040384
    %v60 = vrot.slane %v43, 7
    %v61 = vrot.slane %v44, 7
    %v62 = vsel %vm59, %v60, %v61
    %v63 = vrot.slane %v45, 7
    %v64 = vsel %vm59, %v61, %v63
    %v65 = vrot.slane %v46, 7
    %v66 = vsel %vm59, %v63, %v65
    %v67 = vrot.slane %v47, 7
    %v68 = vrot.slane %v48, 7
    %v69 = vsel %vm59, %v67, %v68
    %v70 = vrot.slane %v49, 7
    %v71 = vsel %vm59, %v68, %v70
    %v72 = vrot.slane %v50, 7
    %v73 = vsel %vm59, %v70, %v72
    %v82 = vsel %vm59, 0.0, %v60
    %v83 = vsel %vm59, 0.0, %v67
    %vm84 = vcmask 1046528
    %v85 = vrot.slane %v43, 1
    %v86 = vrot.slane %v44, 1
    %v87 = vsel %vm84, %v85, %v86
    %v88 = vrot.slane %v45, 1
    %v89 = vsel %vm84, %v86, %v88
    %v90 = vrot.slane %v46, 1
    %v91 = vsel %vm84, %v88, %v90
    %v92 = vrot.slane %v47, 1
    %v93 = vrot.slane %v48, 1
    %v94 = vsel %vm84, %v92, %v93
    %v95 = vrot.slane %v49, 1
    %v96 = vsel %vm84, %v93, %v95
    %v97 = vrot.slane %v50, 1
    %v98 = vsel %vm84, %v95, %v97
    %v107 = vsel %vm84, %v90, 0.0
    %v108 = vsel %vm84, %v97, 0.0
    %v109 = vld [vmem:[#allocation5] sm:$0xff]
    %v110 = vld [vmem:[#allocation5 + $0x8] sm:$0xff]
    %v111 = vld [vmem:[#allocation5 + $0x10] sm:$0xff]
    %v112 = vld [vmem:[#allocation5 + $0x18] sm:$0xff]
    %v113 = vld [vmem:[#allocation5 + $0x20] sm:$0xff]
    %v114 = vld [vmem:[#allocation5 + $0x28] sm:$0xff]
    %v115 = vld [vmem:[#allocation5 + $0x30] sm:$0xff]
    %v116 = vld [vmem:[#allocation5 + $0x38] sm:$0xff]
    %v117 = vld [vmem:[#allocation5 + $0x40] sm:$0xff]
    %v118 = vld [vmem:[#allocation5 + $0x48] sm:$0xff]
    %v119 = vld [vmem:[#allocation5 + $0x50] sm:$0xff]
    %v120 = vld [vmem:[#allocation5 + $0x58] sm:$0xff]
    %v121 = vld [vmem:[#allocation5 + $0x60] sm:$0xff]
    %v122 = vld [vmem:[#allocation5 + $0x68] sm:$0xff]
    %v123 = vld [vmem:[#allocation5 + $0x70] sm:$0xff]
    %v124 = vld [vmem:[#allocation5 + $0x78] sm:$0xff]
    %v125 = vld [vmem:[#allocation5 + $0x80] sm:$0xff]
    %v126 = vld [vmem:[#allocation5 + $0x88] sm:$0xff]
    %v127 = vld [vmem:[#allocation5 + $0x90] sm:$0xff]
    %v128 = vld [vmem:[#allocation5 + $0x98] sm:$0xff]
    %v129 = vld [vmem:[#allocation5 + $0xa0] sm:$0xff]
    %v130 = vld [vmem:[#allocation5 + $0xa8] sm:$0xff]
    %v131 = vld [vmem:[#allocation5 + $0xb0] sm:$0xff]
    %v132 = vld [vmem:[#allocation5 + $0xb8] sm:$0xff]
    %v133 = vld [vmem:[#allocation5 + $0xc0] sm:$0xff]
    %v134 = vld [vmem:[#allocation5 + $0xc8] sm:$0xff]
    %v135 = vld [vmem:[#allocation5 + $0xd0] sm:$0xff]
    %v136 = vld [vmem:[#allocation5 + $0xd8] sm:$0xff]
    %v137 = vld [vmem:[#allocation5 + $0xe0] sm:$0xff]
    %v138 = vld [vmem:[#allocation5 + $0xe8] sm:$0xff]
    %v139 = vld [vmem:[#allocation5 + $0xf0] sm:$0xff]
    %v140 = vld [vmem:[#allocation5 + $0xf8] sm:$0xff]
    %v141 = vld [vmem:[#allocation5 + $0x100] sm:$0xff]
    %v142 = vld [vmem:[#allocation5 + $0x108] sm:$0xff]
    %v143 = vld [vmem:[#allocation5 + $0x110] sm:$0xff]
    %v144 = vld [vmem:[#allocation5 + $0x118] sm:$0xff]
    %v145 = vld [vmem:[#allocation5 + $0x120] sm:$0xff]
    %v146 = vld [vmem:[#allocation5 + $0x128] sm:$0xff]
    %v147 = vld [vmem:[#allocation5 + $0x130] sm:$0xff]
    %v148 = vld [vmem:[#allocation5 + $0x138] sm:$0xff]
    %v149 = vld [vmem:[#allocation5 + $0x140] sm:$0xff]
    %v150 = vld [vmem:[#allocation5 + $0x148] sm:$0xff]
    %v151 = vld [vmem:[#allocation5 + $0x150] sm:$0xff]
    %v152 = vld [vmem:[#allocation5 + $0x158] sm:$0xff]
    %v153 = vld [vmem:[#allocation5 + $0x160] sm:$0xff]
    %v154 = vld [vmem:[#allocation5 + $0x168] sm:$0xff]
    %v155 = vld [vmem:[#allocation5 + $0x170] sm:$0xff]
    %v156 = vld [vmem:[#allocation5 + $0x178] sm:$0xff]
    %157 = vmatprep.subr.mxu0 0.0
    %158 = vmatpush1.msra.mxu0 %v109
    %159 = vmatprep.subr.mxu0 0.0
    %160 = vmatpush1.msra.mxu0 %v110
    %161 = vmatprep.subr.mxu0 0.0
    %162 = vmatpush1.msra.mxu0 %v111
    %163 = vmatprep.subr.mxu0 0.0
    %164 = vmatpush1.msra.mxu0 %v112
    %165 = vmatprep.subr.mxu0 0.0
    %166 = vmatpush1.msra.mxu0 %v113
    %167 = vmatprep.subr.mxu0 0.0
    %168 = vmatpush1.msra.mxu0 %v114
    %169 = vmatprep.subr.mxu0 0.0
    %170 = vmatpush1.msra.mxu0 %v115
    %171 = vmatprep.subr.mxu0 0.0
    %172 = vmatpush1.msra.mxu0 %v116
    %173 = vmatprep.subr.mxu0 0.0
    %174 = vmatpush1.msra.mxu0 %v117
    %175 = vmatprep.subr.mxu0 0.0
    %176 = vmatpush1.msra.mxu0 %v118
    %177 = vmatprep.subr.mxu0 0.0
    %178 = vmatpush1.msra.mxu0 %v119
    %179 = vmatprep.subr.mxu0 0.0
    %180 = vmatpush1.msra.mxu0 %v120
    %181 = vmatprep.subr.mxu0 0.0
    %182 = vmatpush1.msra.mxu0 %v121
    %183 = vmatprep.subr.mxu0 0.0
    %184 = vmatpush1.msra.mxu0 %v122
    %185 = vmatprep.subr.mxu0 0.0
    %186 = vmatpush1.msra.mxu0 %v123
    %187 = vmatprep.subr.mxu0 0.0
    %188 = vmatpush1.msra.mxu0 %v124
    %189 = vmatprep.subr.mxu0 0.0
    %190 = vmatpush1.msra.mxu0 %v125
    %191 = vmatprep.subr.mxu0 0.0
    %192 = vmatpush1.msra.mxu0 %v126
    %193 = vmatprep.subr.mxu0 0.0
    %194 = vmatpush1.msra.mxu0 %v127
    %195 = vmatprep.subr.mxu0 0.0
    %196 = vmatpush1.msra.mxu0 %v128
    %197 = vmatprep.subr.mxu0 0.0
    %198 = vmatpush1.msra.mxu0 %v129
    %199 = vmatprep.subr.mxu0 0.0
    %200 = vmatpush1.msra.mxu0 %v130
    %201 = vmatprep.subr.mxu0 0.0
    %202 = vmatpush1.msra.mxu0 %v131
    %203 = vmatprep.subr.mxu0 0.0
    %204 = vmatpush1.msra.mxu0 %v132
    %205 = vmatprep.subr.mxu0 0.0
    %206 = vmatpush1.msra.mxu0 %v133
    %207 = vmatprep.subr.mxu0 0.0
    %208 = vmatpush1.msra.mxu0 %v134
    %209 = vmatprep.subr.mxu0 0.0
    %210 = vmatpush1.msra.mxu0 %v135
    %211 = vmatprep.subr.mxu0 0.0
    %212 = vmatpush1.msra.mxu0 %v136
    %213 = vmatprep.subr.mxu0 0.0
    %214 = vmatpush1.msra.mxu0 %v137
    %215 = vmatprep.subr.mxu0 0.0
    %216 = vmatpush1.msra.mxu0 %v138
    %217 = vmatprep.subr.mxu0 0.0
    %218 = vmatpush1.msra.mxu0 %v139
    %219 = vmatprep.subr.mxu0 0.0
    %220 = vmatpush1.msra.mxu0 %v140
    %221 = vmatprep.mubr.f32.mxu0 %v43
    %222 = vmatmul.mubr.f32.gmra.mrb[0].mxu0 %v82
    %v223 = vpop.f32.mrb[0].mxu0
    %v224 = vadd.f32 0.0, %v223
    %v225 = vpop.f32.mrb[0].mxu0
    %226 = vmatprep.mubr.f32.mxu0 %v44
    %227 = vmatmul.mubr.f32.gmra.mrb[0].mxu0 %v62
    %v228 = vpop.f32.mrb[0].mxu0
    %v229 = vadd.f32 0.0, %v228
    %v230 = vpop.f32.mrb[0].mxu0
    %231 = vmatprep.mubr.f32.mxu0 %v45
    %232 = vmatmul.mubr.f32.gmra.mrb[0].mxu0 %v64
    %v233 = vpop.f32.mrb[0].mxu0
    %v234 = vadd.f32 0.0, %v233
    %v235 = vpop.f32.mrb[0].mxu0
    %236 = vmatprep.mubr.f32.mxu0 %v46
    %237 = vmatmul.mubr.f32.gmra.mrb[0].mxu0 %v66
    %v238 = vpop.f32.mrb[0].mxu0
    %v239 = vadd.f32 0.0, %v238
    %v240 = vpop.f32.mrb[0].mxu0
    %241 = vmatprep.mubr.f32.mxu0 %v47
    %242 = vmatmul.mubr.f32.gmra.mrb[0].mxu0 %v83
    %v243 = vpop.f32.mrb[0].mxu0
    %v244 = vadd.f32 0.0, %v243
    %v245 = vpop.f32.mrb[0].mxu0
    %246 = vmatprep.mubr.f32.mxu0 %v48
    %247 = vmatmul.mubr.f32.gmra.mrb[0].mxu0 %v69
    %v248 = vpop.f32.mrb[0].mxu0
    %v249 = vadd.f32 0.0, %v248
    %v250 = vpop.f32.mrb[0].mxu0
    %251 = vmatprep.mubr.f32.mxu0 %v49
    %252 = vmatmul.mubr.f32.gmra.mrb[0].mxu0 %v71
    %v253 = vpop.f32.mrb[0].mxu0
    %v254 = vadd.f32 0.0, %v253
    %v255 = vpop.f32.mrb[0].mxu0
    %256 = vmatprep.mubr.f32.mxu0 %v50
    %257 = vmatmul.mubr.f32.gmra.mrb[0].mxu0 %v73
    %v258 = vpop.f32.mrb[0].mxu0
    %v259 = vadd.f32 0.0, %v258
    %v260 = vpop.f32.mrb[0].mxu0
    %261 = vdwg.mxu0
    %262 = vmatprep.subr.mxu0 0.0
    %263 = vmatpush1.msra.mxu0 %v141
    %264 = vmatprep.subr.mxu0 0.0
    %265 = vmatpush1.msra.mxu0 %v142
    %266 = vmatprep.subr.mxu0 0.0
    %267 = vmatpush1.msra.mxu0 %v143
    %268 = vmatprep.subr.mxu0 0.0
    %269 = vmatpush1.msra.mxu0 %v144
    %270 = vmatprep.subr.mxu0 0.0
    %271 = vmatpush1.msra.mxu0 %v145
    %272 = vmatprep.subr.mxu0 0.0
    %273 = vmatpush1.msra.mxu0 %v146
    %274 = vmatprep.subr.mxu0 0.0
    %275 = vmatpush1.msra.mxu0 %v147
    %276 = vmatprep.subr.mxu0 0.0
    %277 = vmatpush1.msra.mxu0 %v148
    %278 = vmatprep.subr.mxu0 0.0
    %279 = vmatpush1.msra.mxu0 %v149
    %280 = vmatprep.subr.mxu0 0.0
    %281 = vmatpush1.msra.mxu0 %v150
    %282 = vmatprep.subr.mxu0 0.0
    %283 = vmatpush1.msra.mxu0 %v151
    %284 = vmatprep.subr.mxu0 0.0
    %285 = vmatpush1.msra.mxu0 %v152
    %286 = vmatprep.subr.mxu0 0.0
    %287 = vmatpush1.msra.mxu0 %v153
    %288 = vmatprep.subr.mxu0 0.0
    %289 = vmatpush1.msra.mxu0 %v154
    %290 = vmatprep.subr.mxu0 0.0
    %291 = vmatpush1.msra.mxu0 %v155
    %292 = vmatprep.subr.mxu0 0.0
    %293 = vmatpush1.msra.mxu0 %v156
    %294 = vmatprep.subr.mxu0 0.0
    %295 = vmatpush1.msra.mxu0 0.0
    %296 = vmatprep.subr.mxu0 0.0
    %297 = vmatpush1.msra.mxu0 0.0
    %298 = vmatprep.subr.mxu0 0.0
    %299 = vmatpush1.msra.mxu0 0.0
    %300 = vmatprep.subr.mxu0 0.0
    %301 = vmatpush1.msra.mxu0 0.0
    %302 = vmatprep.subr.mxu0 0.0
    %303 = vmatpush1.msra.mxu0 0.0
    %304 = vmatprep.subr.mxu0 0.0
    %305 = vmatpush1.msra.mxu0 0.0
    %306 = vmatprep.subr.mxu0 0.0
    %307 = vmatpush1.msra.mxu0 0.0
    %308 = vmatprep.subr.mxu0 0.0
    %309 = vmatpush1.msra.mxu0 0.0
    %310 = vmatprep.subr.mxu0 0.0
    %311 = vmatpush1.msra.mxu0 0.0
    %312 = vmatprep.subr.mxu0 0.0
    %313 = vmatpush1.msra.mxu0 0.0
    %314 = vmatprep.subr.mxu0 0.0
    %315 = vmatpush1.msra.mxu0 0.0
    %316 = vmatprep.subr.mxu0 0.0
    %317 = vmatpush1.msra.mxu0 0.0
    %318 = vmatprep.subr.mxu0 0.0
    %319 = vmatpush1.msra.mxu0 0.0
    %320 = vmatprep.subr.mxu0 0.0
    %321 = vmatpush1.msra.mxu0 0.0
    %322 = vmatprep.subr.mxu0 0.0
    %323 = vmatpush1.msra.mxu0 0.0
    %324 = vmatprep.subr.mxu0 0.0
    %325 = vmatpush1.msra.mxu0 0.0
    %326 = vmatprep.mubr.f32.mxu0 0.0
    %327 = vmatmul.mubr.f32.gmra.mrb[0].mxu0 %v87
    %v328 = vpop.f32.mrb[0].mxu0
    %v329 = vadd.f32 %v224, %v328
    %v330 = vpop.f32.mrb[0].mxu0
    %331 = vmatprep.mubr.f32.mxu0 0.0
    %332 = vmatmul.mubr.f32.gmra.mrb[0].mxu0 %v89
    %v333 = vpop.f32.mrb[0].mxu0
    %v334 = vadd.f32 %v229, %v333
    %v335 = vpop.f32.mrb[0].mxu0
    %336 = vmatprep.mubr.f32.mxu0 0.0
    %337 = vmatmul.mubr.f32.gmra.mrb[0].mxu0 %v91
    %v338 = vpop.f32.mrb[0].mxu0
    %v339 = vadd.f32 %v234, %v338
    %v340 = vpop.f32.mrb[0].mxu0
    %341 = vmatprep.mubr.f32.mxu0 0.0
    %342 = vmatmul.mubr.f32.gmra.mrb[0].mxu0 %v107
    %v343 = vpop.f32.mrb[0].mxu0
    %v344 = vadd.f32 %v239, %v343
    %v345 = vpop.f32.mrb[0].mxu0
    %346 = vmatprep.mubr.f32.mxu0 0.0
    %347 = vmatmul.mubr.f32.gmra.mrb[0].mxu0 %v94
    %v348 = vpop.f32.mrb[0].mxu0
    %v349 = vadd.f32 %v244, %v348
    %v350 = vpop.f32.mrb[0].mxu0
    %351 = vmatprep.mubr.f32.mxu0 0.0
    %352 = vmatmul.mubr.f32.gmra.mrb[0].mxu0 %v96
    %v353 = vpop.f32.mrb[0].mxu0
    %v354 = vadd.f32 %v249, %v353
    %v355 = vpop.f32.mrb[0].mxu0
    %356 = vmatprep.mubr.f32.mxu0 0.0
    %357 = vmatmul.mubr.f32.gmra.mrb[0].mxu0 %v98
    %v358 = vpop.f32.mrb[0].mxu0
    %v359 = vadd.f32 %v254, %v358
    %v360 = vpop.f32.mrb[0].mxu0
    %361 = vmatprep.mubr.f32.mxu0 0.0
    %362 = vmatmul.mubr.f32.gmra.mrb[0].mxu0 %v108
    %v363 = vpop.f32.mrb[0].mxu0
    %v364 = vadd.f32 %v259, %v363
    %v365 = vpop.f32.mrb[0].mxu0
    %366 = vdwg.mxu0
    %367 = vst [vmem:[#allocation7] sm:$0xff] %v329
    %368 = vst [vmem:[#allocation7 + $0x8] sm:$0xff] %v334
    %369 = vst [vmem:[#allocation7 + $0x10] sm:$0xff] %v339
    %370 = vst [vmem:[#allocation7 + $0x18] sm:$0xff] %v344
    %371 = vst [vmem:[#allocation7 + $0x20] sm:$0xff] %v349
    %372 = vst [vmem:[#allocation7 + $0x28] sm:$0xff] %v354
    %373 = vst [vmem:[#allocation7 + $0x30] sm:$0xff] %v359
    %374 = vst [vmem:[#allocation7 + $0x38] sm:$0xff] %v364
    %v375 = vadd.f32 %v329, %v334
    %v376 = vadd.f32 %v375, %v339
    %v377 = vadd.f32 %v376, %v344
    %v378 = vadd.f32 %v377, %v349
    %v379 = vadd.f32 %v378, %v354
    %v380 = vadd.f32 %v379, %v359
    %v381 = vadd.f32 %v380, %v364
    %v382 = vrot.slane %v381, 4
    %v383 = vadd.f32 %v381, %v382
    %v384 = vrot.slane %v383, 2
    %v385 = vadd.f32 %v383, %v384
    %v386 = vrot.slane %v385, 1
    %v387 = vadd.f32 %v385, %v386
    %v388 = vmul.f32 %v329, %v329
    %v389 = vmul.f32 %v334, %v334
    %v390 = vmul.f32 %v339, %v339
    %v391 = vmul.f32 %v344, %v344
    %v392 = vmul.f32 %v349, %v349
    %v393 = vmul.f32 %v354, %v354
    %v394 = vmul.f32 %v359, %v359
    %v395 = vmul.f32 %v364, %v364
    %v396 = vadd.f32 %v388, %v389
    %v397 = vadd.f32 %v396, %v390
    %v398 = vadd.f32 %v397, %v391
    %v399 = vadd.f32 %v398, %v392
    %v400 = vadd.f32 %v399, %v393
    %v401 = vadd.f32 %v400, %v394
    %v402 = vadd.f32 %v401, %v395
    %v403 = vrot.slane %v402, 4
    %v404 = vadd.f32 %v402, %v403
    %v405 = vrot.slane %v404, 2
    %v406 = vadd.f32 %v404, %v405
    %v407 = vrot.slane %v406, 1
    %v408 = vadd.f32 %v406, %v407
    %v409 = vsel %vm59, %v387, %v408
    %vm410 = vcmask 1041408
    %v411 = vsel %vm410, %v409, 0.0
    %412 = vst [vmem:[#allocation8] sm:$0xff] %v411
    // Predicated region
    $region18: #{tpu_custom_call.1} parent=1 // pred_check
      _
    $region19: #{tpu_custom_call.1} parent=1 // pred_check_branch
      %414 = sbr.rel (0) target = $region21
    $region20: #{tpu_custom_call.1} parent=1 // pred_region
      %s416 = ssub.s32 1024, 1024
      %417 = vsyncadd [#allocation4], %s416
      %s418 = sshll.u32 [#allocation7], 4
      %s419 = int_to_ptr.vmem [resolvable:$true] %s418
      %424 = dma.vmem_to_hbm [thread:$0]  %s419, 1024, %s2, [#allocation4], 128, 128, 8
    $region21: #{tpu_custom_call.1} parent=1 // pred_fallthru
      _
    // Predicated region
    $region22: #{tpu_custom_call.1} parent=1 // pred_check
      _
    $region23: #{tpu_custom_call.1} parent=1 // pred_check_branch
      %426 = sbr.rel (0) target = $region25
    $region24: #{tpu_custom_call.1} parent=1 // pred_region
      %s428 = ssub.s32 128, 128
      %429 = vsyncadd [#allocation9], %s428
      %s431 = sshll.u32 [#allocation8], 4
      %s432 = int_to_ptr.vmem [resolvable:$true] %s431
      %434 = dma.vmem_to_hbm [thread:$0]  %s432, 128, %s3, [#allocation9]
    $region25: #{tpu_custom_call.1} parent=1 // pred_fallthru
      _
    // Predicated region
    $region26: #{tpu_custom_call.1} parent=1 // pred_check
      _
    $region27: #{tpu_custom_call.1} parent=1 // pred_check_branch
      %436 = sbr.rel (0) target = $region29
    $region28: #{tpu_custom_call.1} parent=1 // pred_region
      %437 = dma.done [#allocation4], 1024
    $region29: #{tpu_custom_call.1} parent=1 // pred_fallthru
      _
    // Predicated region
    $region30: #{tpu_custom_call.1} parent=1 // pred_check
      _
    $region31: #{tpu_custom_call.1} parent=1 // pred_check_branch
      %439 = sbr.rel (0) target = $region33
    $region32: #{tpu_custom_call.1} parent=1 // pred_region
      %440 = dma.done [#allocation9], 128
    $region33: #{tpu_custom_call.1} parent=1 // pred_fallthru
      _
    %441 = vsyncpa [#allocation3], 1
    %442 = vsyncpa [#allocation6], 1
    %443 = vsyncpa [#allocation4], 1
    %444 = vsyncpa [#allocation9], 1

</llo_original>
